<compile_context>
chip_gen: v7x
topology: tpu7x:2x2x1
jax: 0.10.0
libtpu: 0.0.40
codegen_flags: <defaults>
</compile_context>

<pallas_src>
import math
import numpy as np
import jax
import jax.numpy as jnp
from jax.experimental import pallas as pl
from jax.experimental.pallas import tpu as pltpu


def get_named_beta_schedule(schedule_name: str, timestep: int, beta_max: float = 0.999):
    if schedule_name == "linear":
        scale = 1000 / timestep
        beta_start = scale * 0.0001
        beta_end = scale * 0.02
        return np.linspace(beta_start, beta_end, timestep, dtype=np.float64)
    elif schedule_name == "cosine":
        cos = lambda t: math.cos((t + 0.008) / 1.008 * math.pi * 0.5) ** 2
        return np.array(
            [min(1 - cos((i + 1) / timestep) / cos(i / timestep), beta_max) for i in range(timestep)]
        )
    else:
        raise NotImplementedError(f"Unknown beta schedule: {schedule_name}")


def _diffusion_kernel(scale_ref, x_ref, e_ref, o_ref):
    # scale_ref: VMEM [TM, 2] f32, column 0 = sqrt(alpha[t]), column 1 = sqrt(1 - alpha[t])
    # x_ref / e_ref / o_ref: VMEM [TM, TN] tiles (f32 or bf16)
    sc = scale_ref[...]
    sa = sc[:, 0:1]                       # [TM, 1]
    s1 = sc[:, 1:2]                       # [TM, 1]
    xv = x_ref[...].astype(jnp.float32)
    ev = e_ref[...].astype(jnp.float32)
    o_ref[...] = (sa * xv + s1 * ev).astype(o_ref.dtype)


def _round_up(x: int, m: int) -> int:
    return (x + m - 1) // m * m


def _pick_tile(dim: int, align: int, cap: int) -> int:
    """Aligned tile size <= cap (ragged last block handled by a cdiv grid).

    If dim <= align, use the full extent (block == full array dim is allowed
    by the (8, 128) tiling rule).
    """
    if dim <= align:
        return dim
    t = min(dim, max(cap, align))
    t = (t // align) * align
    return max(t, align)


def _fold_factor(B: int, F: int, max_r: int = 512) -> int:
    """Smallest R folding [B, F] -> [B*R, F//R] with full (8, 128) density.

    Requires: R | F, (F // R) % 128 == 0, (B * R) % 8 == 0.  Returns 1 when no
    such factor exists (fallback keeps the original layout).
    """
    if B >= 8 or F < 256:
        return 1
    for r in range(2, max_r + 1):
        if F % r:
            continue
        if (F // r) % 128:
            continue
        if (B * r) % 8 == 0:
            return r
    return 1


class DiffusionPallas:
    # Per-array tile cap: 3 arrays x 2 buffers x 4 MiB ~= 24 MiB double-buffered
    # footprint -- safe inside v7x's 64 MiB physical VMEM (32 MiB default scoped)
    # and already in the measured 85%+ of-roofline regime for streaming f32.
    _TILE_BYTES_CAP = 4 * 1024 * 1024

    def __init__(self, beta_schedule_name: str, time_step: int):
        beta = get_named_beta_schedule(beta_schedule_name, time_step).astype(np.float64)
        alpha = 1.0 - beta
        alphas = np.cumprod(alpha, axis=0)
        # Precompute sqrt tables once (removes sqrt from the hot path entirely).
        self.alphas = jnp.asarray(alphas, dtype=jnp.float32)
        self.sqrt_alphas = jnp.asarray(np.sqrt(alphas), dtype=jnp.float32)
        self.sqrt_one_minus_alphas = jnp.asarray(np.sqrt(1.0 - alphas), dtype=jnp.float32)

    def __call__(self, x, e, t):
        # x, e: [B, C, H, W] (float32 or bfloat16) ; t: [B] int
        B, C, H, W = x.shape
        F = C * H * W
        dtype = x.dtype
        itemsize = jnp.dtype(dtype).itemsize
        sub_align = 8 if itemsize >= 4 else (16 if itemsize == 2 else 32)

        # Small-batch densification: fold part of F into the row dim so tiles
        # are fully sublane-dense even when B < 8.
        R = _fold_factor(B, F)
        M, N = B * R, F // R
        x2 = x.reshape(M, N)
        e2 = e.reshape(M, N)

        # Per-row scales, gathered in plain JAX (M elements -> negligible),
        # packed into a single [M, 2] array (one small DMA per row-tile).
        t32 = t.astype(jnp.int32)
        sa = self.sqrt_alphas[t32]                 # [B]
        s1 = self.sqrt_one_minus_alphas[t32]       # [B]
        if R > 1:
            sa = jnp.repeat(sa, R)                 # [M]
            s1 = jnp.repeat(s1, R)                 # [M]
        scales = jnp.stack([sa, s1], axis=-1).astype(jnp.float32)  # [M, 2]

        # Tile selection: sublane-aligned rows, lane-dense (128-aligned) cols,
        # capped at ~4 MiB per array tile.  Ragged dims handled by cdiv grid.
        tile_elems = self._TILE_BYTES_CAP // itemsize
        TM = _pick_tile(M, sub_align, 512)
        tn_cap = max(128, tile_elems // _round_up(TM, sub_align))
        TN = _pick_tile(N, 128, tn_cap)

        grid_m = pl.cdiv(M, TM)
        grid_n = pl.cdiv(N, TN)

        # Megacore (v7x): guarantee >= 2 grid steps along a "parallel" axis so
        # the second TensorCore is not idle.
        if grid_m == 1 and grid_n == 1:
            if N >= 256:
                TN = max(128, (N // 2) // 128 * 128)
                grid_n = pl.cdiv(N, TN)
            elif M >= 2 * sub_align:
                TM = max(sub_align, (M // 2) // sub_align * sub_align)
                grid_m = pl.cdiv(M, TM)

        # VMEM accounting (with layout padding, incl. the lane-padded scale
        # blocks).  Only raise the limit relative to the compiler default.
        tile_bytes = _round_up(TM, sub_align) * _round_up(TN, 128) * itemsize
        scale_bytes = _round_up(TM, 8) * 128 * 4
        vmem_needed = 3 * 2 * tile_bytes + 2 * scale_bytes + (1 << 20)
        vmem_limit = int(max(vmem_needed, 32 * 1024 * 1024))

        out = pl.pallas_call(
            _diffusion_kernel,
            out_shape=jax.ShapeDtypeStruct((M, N), dtype),
            grid=(grid_m, grid_n),
            in_specs=[
                # Packed per-row scales; block index constant over the inner
                # (lane) grid axis so Pallas elides re-copying it.
                pl.BlockSpec((TM, 2), lambda i, j: (i, 0)),
                pl.BlockSpec((TM, TN), lambda i, j: (i, j)),  # x tile
                pl.BlockSpec((TM, TN), lambda i, j: (i, j)),  # e tile
            ],
            out_specs=pl.BlockSpec((TM, TN), lambda i, j: (i, j)),
            compiler_params=pltpu.CompilerParams(
                dimension_semantics=("parallel", "parallel"),
                vmem_limit_bytes=vmem_limit,
            ),
        )(scales, x2, e2)

        return out.reshape(B, C, H, W)


if __name__ == "__main__":
    B, C, H, W = 2, 4, 16, 16
    T = 8

    key = jax.random.PRNGKey(0)
    kx, ke, kt = jax.random.split(key, 3)
    x = jax.random.normal(kx, (B, C, H, W), dtype=jnp.float32)
    e = jax.random.normal(ke, (B, C, H, W), dtype=jnp.float32)
    t = jax.random.randint(kt, (B,), 0, T, dtype=jnp.int32)

    model = DiffusionPallas("cosine", T)
    out = model(x, e, t)
    jax.block_until_ready(out)

    # Pure-JAX reference (same semantics as the PyTorch forward).
    a = model.alphas[t][:, None, None, None]
    ref = jnp.sqrt(a) * x + jnp.sqrt(1.0 - a) * e
    assert jnp.allclose(out, ref, atol=1e-6, rtol=1e-6), "mismatch vs reference"

    print("KERNEL_OK")
</pallas_src>

<mosaic_0001>
module attributes {stable_mosaic.version = 11 : i64} {
  func.func @_diffusion_kernel(%arg0: i32, %arg1: i32, %arg2: memref<8x2xf32, #tpu.memory_space<vmem>>, %arg3: memref<8x128xf32, #tpu.memory_space<vmem>>, %arg4: memref<8x128xf32, #tpu.memory_space<vmem>>, %arg5: memref<8x128xf32, #tpu.memory_space<vmem>>) attributes {dimension_semantics = [#tpu.dimension_semantics<parallel>, #tpu.dimension_semantics<parallel>], iteration_bounds = array<i64: 1, 2>, scalar_prefetch = 0 : i64, scratch_operands = 0 : i64, tpu.core_type = #tpu.core_type<tc>, window_params = [{transform_indices = @transform_0, window_bounds = array<i64: 8, 2>}, {transform_indices = @transform_1, window_bounds = array<i64: 8, 128>}, {transform_indices = @transform_2, window_bounds = array<i64: 8, 128>}, {transform_indices = @transform_3, window_bounds = array<i64: 8, 128>}]} {
    %c0 = arith.constant 0 : index
    %c0_0 = arith.constant 0 : index
    %0 = vector.load %arg2[%c0, %c0_0] : memref<8x2xf32, #tpu.memory_space<vmem>>, vector<8x2xf32>
    %1 = vector.extract_strided_slice %0 {offsets = [0, 0], sizes = [8, 1], strides = [1, 1]} : vector<8x2xf32> to vector<8x1xf32>
    %2 = vector.extract_strided_slice %0 {offsets = [0, 1], sizes = [8, 1], strides = [1, 1]} : vector<8x2xf32> to vector<8x1xf32>
    %c0_1 = arith.constant 0 : index
    %c0_2 = arith.constant 0 : index
    %3 = vector.load %arg3[%c0_1, %c0_2] : memref<8x128xf32, #tpu.memory_space<vmem>>, vector<8x128xf32>
    %c0_3 = arith.constant 0 : index
    %c0_4 = arith.constant 0 : index
    %4 = vector.load %arg4[%c0_3, %c0_4] : memref<8x128xf32, #tpu.memory_space<vmem>>, vector<8x128xf32>
    %5 = vector.broadcast %1 : vector<8x1xf32> to vector<8x128xf32>
    %6 = arith.mulf %5, %3 : vector<8x128xf32>
    %7 = vector.broadcast %2 : vector<8x1xf32> to vector<8x128xf32>
    %8 = arith.mulf %7, %4 : vector<8x128xf32>
    %9 = arith.addf %6, %8 : vector<8x128xf32>
    %c0_5 = arith.constant 0 : index
    %c0_6 = arith.constant 0 : index
    %10 = vector.load %arg5[%c0_5, %c0_6] : memref<8x128xf32, #tpu.memory_space<vmem>>, vector<8x128xf32>
    tpu.vector_store %arg5[%c0_5, %c0_6], %9 {strides = array<i32>} : memref<8x128xf32, #tpu.memory_space<vmem>>, vector<8x128xf32>,
    return
  }
  func.func @transform_0(%arg0: i32, %arg1: i32) -> (i32, i32) {
    %c0_i32 = arith.constant 0 : i32
    %c0_i32_0 = arith.constant 0 : i32
    return %arg0, %c0_i32 : i32, i32
  }
  func.func @transform_1(%arg0: i32, %arg1: i32) -> (i32, i32) {
    %c0_i32 = arith.constant 0 : i32
    return %arg0, %arg1 : i32, i32
  }
  func.func @transform_2(%arg0: i32, %arg1: i32) -> (i32, i32) {
    %c0_i32 = arith.constant 0 : i32
    return %arg0, %arg1 : i32, i32
  }
  func.func @transform_3(%arg0: i32, %arg1: i32) -> (i32, i32) {
    %c0_i32 = arith.constant 0 : i32
    return %arg0, %arg1 : i32, i32
  }
}

</mosaic_0001>

<llo_original>
// kernel: tpu_custom_call.1
$region0: #{tpu_custom_call.1}
  #allocation0 [shape = 'u32[]', space=smem, size = 0x4, offset = 0x4, fixed_abs, tag = 'smem constant byte address 0x4 - core index']
  #allocation1 [shape = 'u32[144,128]{1,0:T(1,128)}', space=vmem, size = 0x12000, scoped, tag = 'internal scratch']
  %s0 = inlined_call_operand.vmem [shape: f32[8,2], index: 0, kind: input, shape index: {}]
  %s1 = inlined_call_operand.hbm [shape: f32[8,256], index: 1, kind: input, shape index: {}]
  %s2 = inlined_call_operand.vmem [shape: f32[8,256], index: 2, kind: input, shape index: {}]
  %s3 = inlined_call_operand.hbm [shape: f32[8,256], index: 3, kind: output, shape index: {}]
  %s4 = sld [smem:[#allocation0]]
  $region49: #{tpu_custom_call.1} parent=0
    _
  %s6 = ssub.s32 1, %s4
  %s7 = scalar_select 0, %s6, %s4
  $region1: #{tpu_custom_call.1} parent=0
    #allocation2 [shape = 'u8[8192]{0}', space=vmem, size = 0x2000, scoped, tag = 'input window, operand 1']
    #allocation3 [shape = 's32[2]{0}', space=sflag, size = 0x8, scoped, tag = 'scoped memory for tpu_custom_call.1']
    #allocation4 [shape = 's32[2]{0}', space=sflag, size = 0x8, scoped, tag = 'scoped memory for tpu_custom_call.1']
    #allocation5 [shape = 'u8[8192]{0}', space=vmem, size = 0x2000, scoped, tag = 'output window, operand 0']
    %8 = vsyncpa [#allocation3], 0
    %s9 = scalar_lea.sflag [#allocation3], 1
    %10 = vsyncpa %s9, 0
    %11 = vsyncpa [#allocation4], 0
    %s12 = scalar_lea.sflag [#allocation4], 1
    %13 = vsyncpa %s12, 0
    loop: start=0, step=1, limit=4
    $region2: #{tpu_custom_call.1} parent=1 // loop_pre_header
      _
    $region3: #{tpu_custom_call.1} parent=1 // loop_header
      %s15 = sphi 0, %s19
      %p16 = scmp.ge.s32.totalorder %s15, 4
      %s22 = sphi 0, %s34
      %s23 = sphi 0, %s30
      %s24 = sphi 0, %s22
      %s25 = sphi 0, %s23
      %s26 = sphi 0, %s24
      %s27 = sphi 0, %s25
      %s37 = sphi 0, %s39
      %s40 = sphi 0, %s37
      %s41 = sphi 0, %s40
      %s57 = sphi 0, %s41
      %s65 = sphi 0, %s67
      %s68 = sphi 0, %s65
      %s69 = sphi 0, %s68
      %s85 = sphi 0, %s69
      %s93 = sphi 0, %s95
      %s96 = sphi 0, %s93
      %s97 = sphi 0, %s96
      %s113 = sphi 0, %s97
      %s121 = sphi 0, %s123
      %s124 = sphi 0, %s121
      %s125 = sphi 0, %s124
      %s141 = sphi 0, %s125
    $region4: #{tpu_custom_call.1} parent=1 // loop_header_branch
      %18 = sbr.rel (%p16) target = $region8
    $region5: #{tpu_custom_call.1} parent=1 // loop_body
      %s20 = ssub.s32 %s15, 1
      %s21 = ssub.s32 %s15, 2
      %s28 = sadd.s32 1, %s23
      %p29 = scmp.ge.s32.totalorder %s28, 2
      %s30 = scalar_select %p29, 0, %s28
      %s31 = sadd.s32 1, %s22
      %s32 = scalar_select %p29, %s31, %s22
      %p33 = scmp.ge.s32.totalorder %s32, 1
      %s34 = scalar_select %p33, 0, %s32
      %s35 = ssub.s32 %s22, %s34
      %p36 = scmp.eq.s32.totalorder %s35, 0
      %s38 = sadd.s32 %s37, 1
      %s39 = scalar_select %p36, %s37, %s38
      %p42 = pneg %p36
      %p43 = scmp.eq.s32.totalorder %s15, 1
      %p44 = por %p42, %p43
      %p45 = scmp.ne.s32.totalorder %s37, %s40
      %p46 = scmp.eq.s32.totalorder %s15, 0
      %p47 = por %p45, %p46
      %p48 = scmp.ne.s32.totalorder %s37, %s40
      %p49 = scmp.eq.s32.totalorder %s20, 1
      %p50 = por %p48, %p49
      %p51 = scmp.ne.s32.totalorder %s40, %s41
      %p52 = scmp.eq.s32.totalorder %s20, 0
      %p53 = por %p51, %p52
      %p54 = scmp.ne.s32.totalorder %s40, %s41
      %p55 = scmp.eq.s32.totalorder %s21, 1
      %p56 = por %p54, %p55
      %p58 = scmp.ne.s32.totalorder %s41, %s57
      %p59 = scmp.eq.s32.totalorder %s21, 0
      %p60 = por %p58, %p59
      %s61 = ssub.s32 %s22, %s34
      %s62 = ssub.s32 %s23, %s30
      %s63 = sor.u32 %s61, %s62
      %p64 = scmp.eq.s32.totalorder %s63, 0
      %s66 = sadd.s32 %s65, 1
      %s67 = scalar_select %p64, %s65, %s66
      %p70 = pneg %p64
      %p71 = scmp.eq.s32.totalorder %s15, 1
      %p72 = por %p70, %p71
      %p73 = scmp.ne.s32.totalorder %s65, %s68
      %p74 = scmp.eq.s32.totalorder %s15, 0
      %p75 = por %p73, %p74
      %p76 = scmp.ne.s32.totalorder %s65, %s68
      %p77 = scmp.eq.s32.totalorder %s20, 1
      %p78 = por %p76, %p77
      %p79 = scmp.ne.s32.totalorder %s68, %s69
      %p80 = scmp.eq.s32.totalorder %s20, 0
      %p81 = por %p79, %p80
      %p82 = scmp.ne.s32.totalorder %s68, %s69
      %p83 = scmp.eq.s32.totalorder %s21, 1
      %p84 = por %p82, %p83
      %p86 = scmp.ne.s32.totalorder %s69, %s85
      %p87 = scmp.eq.s32.totalorder %s21, 0
      %p88 = por %p86, %p87
      %s89 = ssub.s32 %s22, %s34
      %s90 = ssub.s32 %s23, %s30
      %s91 = sor.u32 %s89, %s90
      %p92 = scmp.eq.s32.totalorder %s91, 0
      %s94 = sadd.s32 %s93, 1
      %s95 = scalar_select %p92, %s93, %s94
      %p98 = pneg %p92
      %p99 = scmp.eq.s32.totalorder %s15, 1
      %p100 = por %p98, %p99
      %p101 = scmp.ne.s32.totalorder %s93, %s96
      %p102 = scmp.eq.s32.totalorder %s15, 0
      %p103 = por %p101, %p102
      %p104 = scmp.ne.s32.totalorder %s93, %s96
      %p105 = scmp.eq.s32.totalorder %s20, 1
      %p106 = por %p104, %p105
      %p107 = scmp.ne.s32.totalorder %s96, %s97
      %p108 = scmp.eq.s32.totalorder %s20, 0
      %p109 = por %p107, %p108
      %p110 = scmp.ne.s32.totalorder %s96, %s97
      %p111 = scmp.eq.s32.totalorder %s21, 1
      %p112 = por %p110, %p111
      %p114 = scmp.ne.s32.totalorder %s97, %s113
      %p115 = scmp.eq.s32.totalorder %s21, 0
      %p116 = por %p114, %p115
      %s117 = ssub.s32 %s22, %s34
      %s118 = ssub.s32 %s23, %s30
      %s119 = sor.u32 %s117, %s118
      %p120 = scmp.eq.s32.totalorder %s119, 0
      %s122 = sadd.s32 %s121, 1
      %s123 = scalar_select %p120, %s121, %s122
      %p126 = pneg %p120
      %p127 = scmp.eq.s32.totalorder %s15, 1
      %p128 = por %p126, %p127
      %p129 = scmp.ne.s32.totalorder %s121, %s124
      %p130 = scmp.eq.s32.totalorder %s15, 0
      %p131 = por %p129, %p130
      %p132 = scmp.ne.s32.totalorder %s121, %s124
      %p133 = scmp.eq.s32.totalorder %s20, 1
      %p134 = por %p132, %p133
      %p135 = scmp.ne.s32.totalorder %s124, %s125
      %p136 = scmp.eq.s32.totalorder %s20, 0
      %p137 = por %p135, %p136
      %p138 = scmp.ne.s32.totalorder %s124, %s125
      %p139 = scmp.eq.s32.totalorder %s21, 1
      %p140 = por %p138, %p139
      %p142 = scmp.ne.s32.totalorder %s125, %s141
      %p143 = scmp.eq.s32.totalorder %s21, 0
      %p144 = por %p142, %p143
      %p145 = scmp.le.s32.totalorder 1, %s15
      %p146 = scmp.lt.s32.totalorder %s15, 3
      %p147 = pnand %p145, %p146
      %p148 = pneg %p147
      // Predicated region
      $region9: #{tpu_custom_call.1} parent=5 // pred_check
        _
      $region10: #{tpu_custom_call.1} parent=5 // pred_check_branch
        %150 = sbr.rel (%p147) target = $region12
      $region11: #{tpu_custom_call.1} parent=5 // pred_region
        %s151 = ssub.s32 %s15, 1
        // Predicated region
        $region13: #{tpu_custom_call.1} parent=11 // pred_check
          %p152 = pneg %p53
        $region14: #{tpu_custom_call.1} parent=11 // pred_check_branch
          %154 = sbr.rel (%p152) target = $region16
        $region15: #{tpu_custom_call.1} parent=11 // pred_region
          %p155 = scmp.lt.s32.totalorder %s24, 0
          %s156 = scalar_select %p155, %s24, 0
          %s157 = smul.addr %s156, 8
          %s158 = scalar_lea.vmem %s0, %s157
        $region16: #{tpu_custom_call.1} parent=11 // pred_fallthru
          _
      $region12: #{tpu_custom_call.1} parent=5 // pred_fallthru
        _
      %p159 = scmp.lt.s32.totalorder %s15, 2
      // Predicated region
      $region17: #{tpu_custom_call.1} parent=5 // pred_check
        %p160 = pneg %p159
      $region18: #{tpu_custom_call.1} parent=5 // pred_check_branch
        %162 = sbr.rel (%p160) target = $region20
      $region19: #{tpu_custom_call.1} parent=5 // pred_region
        // Predicated region
        $region21: #{tpu_custom_call.1} parent=19 // pred_check
          %p163 = pneg %p75
        $region22: #{tpu_custom_call.1} parent=19 // pred_check_branch
          %165 = sbr.rel (%p163) target = $region24
        $region23: #{tpu_custom_call.1} parent=19 // pred_region
          %s166 = sand.u32 %s65, 1
          %s167 = scalar_lea.sflag [#allocation3], %s166
          %s168 = sand.u32 %s65, 1
          %s169 = smul.addr %s168, 8
          %s170 = scalar_lea.vmem [#allocation2], %s169
          %s172 = ssub.s32 128, 128
          %173 = vsyncadd %s167, %s172
          %s174 = smul.addr %s22, 2
          %s175 = sadd.s32 %s23, %s174
          %s176 = smul.addr %s175, 128
          %s177 = scalar_lea.hbm %s1, %s176
          %s179 = sshll.u32 %s170, 4
          %s180 = int_to_ptr.vmem [resolvable:$true] %s179
          %182 = dma.hbm_to_vmem [thread:$0]  %s177, 128, %s180, %s167
        $region24: #{tpu_custom_call.1} parent=19 // pred_fallthru
          _
        // Predicated region
        $region25: #{tpu_custom_call.1} parent=19 // pred_check
          %p183 = pneg %p103
        $region26: #{tpu_custom_call.1} parent=19 // pred_check_branch
          %185 = sbr.rel (%p183) target = $region28
        $region27: #{tpu_custom_call.1} parent=19 // pred_region
          %p186 = scmp.lt.s32.totalorder %s22, 0
          %s187 = scalar_select %p186, %s22, 0
          %p188 = scmp.lt.s32.totalorder %s23, 1
          %s189 = scalar_select %p188, %s23, 1
          %s190 = smul.addr %s187, 2
          %s191 = sadd.s32 %s189, %s190
          %s192 = smul.addr %s191, 8
          %s193 = scalar_lea.vmem %s2, %s192
        $region28: #{tpu_custom_call.1} parent=19 // pred_fallthru
          _
      $region20: #{tpu_custom_call.1} parent=5 // pred_fallthru
        _
      %p194 = scmp.le.s32.totalorder 1, %s15
      %p195 = scmp.lt.s32.totalorder %s15, 3
      %p196 = pnand %p194, %p195
      %p197 = pneg %p196
      // Predicated region
      $region29: #{tpu_custom_call.1} parent=5 // pred_check
        _
      $region30: #{tpu_custom_call.1} parent=5 // pred_check_branch
        %199 = sbr.rel (%p196) target = $region32
      $region31: #{tpu_custom_call.1} parent=5 // pred_region
        %s200 = ssub.s32 %s15, 1
        %s201 = sand.u32 %s68, 1
        %s202 = scalar_lea.sflag [#allocation3], %s201
        %s203 = sand.u32 %s68, 1
        %s204 = smul.addr %s203, 8
        %s205 = scalar_lea.vmem [#allocation2], %s204
        // Predicated region
        $region33: #{tpu_custom_call.1} parent=31 // pred_check
          %p206 = pneg %p81
        $region34: #{tpu_custom_call.1} parent=31 // pred_check_branch
          %208 = sbr.rel (%p206) target = $region36
        $region35: #{tpu_custom_call.1} parent=31 // pred_region
          %209 = dma.done %s202, 128
        $region36: #{tpu_custom_call.1} parent=31 // pred_fallthru
          _
        %p210 = scmp.lt.s32.totalorder %s24, 0
        %s211 = scalar_select %p210, %s24, 0
        %s212 = smul.addr %s211, 8
        %s213 = scalar_lea.vmem %s0, %s212
        %p214 = pneg %p53
        %p215 = pneg %p50
        %s216 = sand.u32 %s68, 1
        %s217 = scalar_lea.sflag [#allocation3], %s216
        %s218 = sand.u32 %s68, 1
        %s219 = smul.addr %s218, 8
        %s220 = scalar_lea.vmem [#allocation2], %s219
        %p221 = pneg %p81
        %p222 = pneg %p78
        %p223 = scmp.lt.s32.totalorder %s24, 0
        %s224 = scalar_select %p223, %s24, 0
        %p225 = scmp.lt.s32.totalorder %s25, 1
        %s226 = scalar_select %p225, %s25, 1
        %s227 = smul.addr %s224, 2
        %s228 = sadd.s32 %s226, %s227
        %s229 = smul.addr %s228, 8
        %s230 = scalar_lea.vmem %s2, %s229
        %p231 = pneg %p109
        %p232 = pneg %p106
        %p233 = pneg %p137
        %p234 = pneg %p134
        %s235 = sand.u32 %s124, 1
        %s236 = scalar_lea.sflag [#allocation4], %s235
        %s237 = sand.u32 %s124, 1
        %s238 = smul.addr %s237, 8
        %s239 = scalar_lea.vmem [#allocation5], %s238
        %p240 = scmp.lt.s32.totalorder %s24, 0
        %s241 = scalar_select %p240, %s24, 0
        %s242 = smul.addr %s241, 8
        %s243 = scalar_lea.vmem %s0, %s242
        %p244 = scmp.lt.s32.totalorder %s24, 0
        %s245 = scalar_select %p244, %s24, 0
        %p246 = scmp.lt.s32.totalorder %s25, 1
        %s247 = scalar_select %p246, %s25, 1
        %s248 = smul.addr %s245, 2
        %s249 = sadd.s32 %s247, %s248
        %s250 = smul.addr %s249, 8
        %s251 = scalar_lea.vmem %s2, %s250
        %v252 = vld [vmem:[%s243] sm:$0xff]
        %v253 = vld [vmem:[%s205] sm:$0xff]
        %v254 = vld [vmem:[%s251] sm:$0xff]
        %256 = vset.pattern.permute.xlu0 0
        %257 = vperm.xlu0 %256, %v252
        %v258 = vpop.permute.xlu0 %257
        %v260 = vmul.f32 %v258, %v253
        %261 = vset.pattern.permute.xlu0 1
        %262 = vperm.xlu0 %261, %v252
        %v263 = vpop.permute.xlu0 %262
        %v265 = vmul.f32 %v263, %v254
        %v266 = vadd.f32 %v260, %v265
        %267 = vst [vmem:[%s239] sm:$0xff] %v266
        %s268 = sand.u32 %s124, 1
        %s269 = scalar_lea.sflag [#allocation4], %s268
        %s270 = sand.u32 %s124, 1
        %s271 = smul.addr %s270, 8
        %s272 = scalar_lea.vmem [#allocation5], %s271
        // Predicated region
        $region37: #{tpu_custom_call.1} parent=31 // pred_check
          %p273 = pneg %p134
        $region38: #{tpu_custom_call.1} parent=31 // pred_check_branch
          %275 = sbr.rel (%p273) target = $region40
        $region39: #{tpu_custom_call.1} parent=31 // pred_region
          %s277 = ssub.s32 128, 128
          %278 = vsyncadd %s269, %s277
          %s279 = smul.addr %s24, 2
          %s280 = sadd.s32 %s25, %s279
          %s281 = smul.addr %s280, 128
          %s282 = scalar_lea.hbm %s3, %s281
          %s284 = sshll.u32 %s272, 4
          %s285 = int_to_ptr.vmem [resolvable:$true] %s284
          %287 = dma.vmem_to_hbm [thread:$0]  %s285, 128, %s282, %s269
        $region40: #{tpu_custom_call.1} parent=31 // pred_fallthru
          _
      $region32: #{tpu_custom_call.1} parent=5 // pred_fallthru
        _
      %p288 = scmp.le.s32.totalorder 2, %s15
      // Predicated region
      $region41: #{tpu_custom_call.1} parent=5 // pred_check
        %p289 = pneg %p288
      $region42: #{tpu_custom_call.1} parent=5 // pred_check_branch
        %291 = sbr.rel (%p289) target = $region44
      $region43: #{tpu_custom_call.1} parent=5 // pred_region
        %s292 = ssub.s32 %s15, 2
        // Predicated region
        $region45: #{tpu_custom_call.1} parent=43 // pred_check
          %p293 = pneg %p140
        $region46: #{tpu_custom_call.1} parent=43 // pred_check_branch
          %295 = sbr.rel (%p293) target = $region48
        $region47: #{tpu_custom_call.1} parent=43 // pred_region
          %s296 = sand.u32 %s125, 1
          %s297 = scalar_lea.sflag [#allocation4], %s296
          %s298 = sand.u32 %s125, 1
          %s299 = smul.addr %s298, 8
          %s300 = scalar_lea.vmem [#allocation5], %s299
          %301 = dma.done %s297, 128
        $region48: #{tpu_custom_call.1} parent=43 // pred_fallthru
          _
      $region44: #{tpu_custom_call.1} parent=5 // pred_fallthru
        _
    $region6: #{tpu_custom_call.1} parent=1 // loop_footer
      %s19 = sadd.s32 1, %s15
    $region7: #{tpu_custom_call.1} parent=1 // loop_footer_branch
      %14 = sbr.rel target = $region3
    $region8: #{tpu_custom_call.1} parent=1 // loop_exit
      _
    %302 = vsyncpa [#allocation3], 1
    %s303 = scalar_lea.sflag [#allocation3], 1
    %304 = vsyncpa %s303, 1
    %305 = vsyncpa [#allocation4], 1
    %s306 = scalar_lea.sflag [#allocation4], 1
    %307 = vsyncpa %s306, 1

</llo_original>
